<compile_context>
chip_gen: v7x
topology: tpu7x:2x2x1
jax: 0.10.0
libtpu: 0.0.40
codegen_flags: <defaults>
</compile_context>

<pallas_src>
import jax
import jax.numpy as jnp
from jax.experimental import pallas as pl
from jax.experimental.pallas import tpu as pltpu

BN_EPS = 1e-5


def _round_up(x, m):
    return ((x + m - 1) // m) * m


def _sigmoid(x):
    # sigmoid(x) == 0.5*tanh(0.5*x) + 0.5  (one EUP op, no divide; matches
    # jax.nn.sigmoid to float32 precision).
    return 0.5 * jnp.tanh(0.5 * x) + 0.5


def _default_vmem_limit_bytes():
    """Per-generation VMEM budget: ~70% of physical, capped at 96 MiB.
    v7x (64 MiB physical) -> ~44 MiB; v5e/v6e (128 MiB) -> ~90 MiB."""
    try:
        cap = int(pltpu.get_tpu_info().vmem_capacity_bytes)
    except Exception:
        cap = 64 << 20  # conservative fallback (v7x per-TC physical VMEM)
    return min(int(cap * 0.7), 96 << 20)


# ----------------------------------------------------------------------------
# Stage 1 kernel: hidden transform (Linear -> BN -> Sigmoid) x 2, run ONCE.
# Single program, all operands resident in VMEM (tiny: B x H, H x H).
# ----------------------------------------------------------------------------
def _transform_kernel(x_ref, w1_ref, b1_ref, g1_ref, be1_ref,
                      w2_ref, b2_ref, g2_ref, be2_ref, h_ref):
    def dense_bn_sigmoid(inp, w, b, g, beta):
        z = jnp.dot(inp, w, preferred_element_type=jnp.float32) + b
        # Training-mode BatchNorm1d: batch mean, biased batch variance.
        # Two-pass form (no E[x^2]-mean^2 catastrophic cancellation).
        mean = jnp.mean(z, axis=0, keepdims=True)
        cen = z - mean
        var = jnp.mean(cen * cen, axis=0, keepdims=True)
        z = cen * jax.lax.rsqrt(var + BN_EPS) * g + beta
        return _sigmoid(z)

    h = dense_bn_sigmoid(x_ref[...], w1_ref[...], b1_ref[...],
                         g1_ref[...], be1_ref[...])
    h = dense_bn_sigmoid(h, w2_ref[...], b2_ref[...],
                         g2_ref[...], be2_ref[...])
    h_ref[...] = h


# ----------------------------------------------------------------------------
# Stage 2 kernel: vocab-tiled decode.  HBM-bound on the (H, V_pad) embedding
# read; output tile (B, TILE_V) is lane-dense.
# ----------------------------------------------------------------------------
def _decode_kernel(h_ref, wembT_ref, out_ref):
    h = h_ref[...]
    if h.dtype != wembT_ref.dtype:
        # bf16 x bf16 MXU path when the embedding is stored in bf16.
        h = h.astype(wembT_ref.dtype)
    dec = jnp.dot(h, wembT_ref[...], preferred_element_type=jnp.float32)
    out_ref[...] = _sigmoid(dec).astype(out_ref.dtype)


# ----------------------------------------------------------------------------
# One-time parameter preparation (do this at init, NOT per forward call).
# ----------------------------------------------------------------------------
def prepare_decoder_params(params, *, emb_dtype=jnp.float32,
                           target_tile_bytes=4 << 20, max_batch=128,
                           vmem_limit_bytes=None):
    """Pad + pre-transpose the word embedding to (H, V_pad) (optionally bf16),
    lift 1-D params to (1, H) rows, and pick a byte-sized, VMEM-budgeted
    vocab tile.  Returns a dict consumed by `decoder_gvae_forward`."""
    w1, b1, g1, be1, w2, b2, g2, be2, w_emb = params
    V, H = w_emb.shape
    emb_bytes = jnp.dtype(emb_dtype).itemsize
    vmem_limit = int(vmem_limit_bytes or _default_vmem_limit_bytes())

    # VMEM budget: double-buffered embedding tile + double-buffered (f32)
    # output tile of up to `max_batch` rows must fit in ~80% of the limit.
    usable = max(int(vmem_limit * 0.8) - (1 << 20), 1 << 20)
    per_row = 2 * H * emb_bytes + 2 * max_batch * 4
    tile_v = min(target_tile_bytes // (H * emb_bytes),   # byte-sized tile
                 max(128, usable // per_row))            # VMEM cap
    tile_v = min(tile_v, _round_up(V, 128))              # never overshoot V
    if V > 128:                                          # >=2 tiles (v7x megacore)
        tile_v = min(tile_v, _round_up((V + 1) // 2, 128))
    tile_v = max(128, (int(tile_v) // 128) * 128)        # lane-dense multiple of 128

    V_pad = _round_up(V, tile_v)
    wemb_t = jnp.transpose(
        jnp.pad(w_emb, ((0, V_pad - V), (0, 0)))).astype(emb_dtype)
    # TODO(synk): on v7x, fp8 embedding storage would halve HBM traffic again.

    row = lambda v: jnp.asarray(v, jnp.float32).reshape(1, -1)
    return dict(
        w1=w1, b1=row(b1), g1=row(g1), be1=row(be1),
        w2=w2, b2=row(b2), g2=row(g2), be2=row(be2),
        wemb_t=wemb_t, vocab=int(V), tile_v=int(tile_v),
        vmem_limit_bytes=vmem_limit,
    )


# ----------------------------------------------------------------------------
# Forward pass.
# ----------------------------------------------------------------------------
def decoder_gvae_forward(x, prep, *, out_dtype=jnp.float32, emb_buffers=None):
    """x: (B, input_dim) f32.  prep: output of prepare_decoder_params.
    Returns (B, vocab) in `out_dtype`."""
    B = x.shape[0]
    wemb_t = prep["wemb_t"]
    H, V_pad = wemb_t.shape
    V = prep["vocab"]
    tile_v = prep["tile_v"]
    num_tiles = V_pad // tile_v

    # Stage 1: hidden transform, computed once (hoisted out of the vocab loop).
    h = pl.pallas_call(
        _transform_kernel,
        out_shape=jax.ShapeDtypeStruct((B, H), jnp.float32),
    )(x, prep["w1"], prep["b1"], prep["g1"], prep["be1"],
      prep["w2"], prep["b2"], prep["g2"], prep["be2"])

    # Stage 2: vocab-tiled decode.  Independent tiles -> "parallel" (both TCs
    # on v7x); Pallas double-buffers the embedding/output tiles.
    emb_spec_kwargs = {}
    if emb_buffers is not None and emb_buffers != 2:
        # Deeper pipelining only if a trace shows exposed DMA (and it fits VMEM).
        emb_spec_kwargs["pipeline_mode"] = pl.Buffered(emb_buffers)

    out_bytes = jnp.dtype(out_dtype).itemsize
    emb_bytes = wemb_t.dtype.itemsize

    out = pl.pallas_call(
        _decode_kernel,
        out_shape=jax.ShapeDtypeStruct((B, V_pad), out_dtype),
        grid=(num_tiles,),
        in_specs=[
            pl.BlockSpec((B, H), lambda v: (0, 0)),                 # resident
            pl.BlockSpec((H, tile_v), lambda v: (0, v), **emb_spec_kwargs),
        ],
        out_specs=pl.BlockSpec((B, tile_v), lambda v: (0, v)),
        compiler_params=pltpu.CompilerParams(
            dimension_semantics=("parallel",),
            vmem_limit_bytes=int(prep["vmem_limit_bytes"]),
        ),
        cost_estimate=pl.CostEstimate(
            flops=int(2 * B * H * V_pad),
            transcendentals=int(B * V_pad),
            bytes_accessed=int(B * H * 4 + V_pad * H * emb_bytes
                               + B * V_pad * out_bytes),
        ),
    )(h, wemb_t)

    return out[:, :V] if V_pad != V else out


# ----------------------------------------------------------------------------
# Synthetic init + pure-JAX reference (for correctness checks).
# ----------------------------------------------------------------------------
def init_params(key, input_dim, hidden_dim, output_dim):
    ks = jax.random.split(key, 5)
    lim1 = 1.0 / jnp.sqrt(jnp.float32(input_dim))
    w1 = jax.random.uniform(ks[0], (input_dim, hidden_dim), jnp.float32, -lim1, lim1)
    b1 = jax.random.uniform(ks[1], (hidden_dim,), jnp.float32, -lim1, lim1)
    lim2 = 1.0 / jnp.sqrt(jnp.float32(hidden_dim))
    w2 = jax.random.uniform(ks[2], (hidden_dim, hidden_dim), jnp.float32, -lim2, lim2)
    b2 = jax.random.uniform(ks[3], (hidden_dim,), jnp.float32, -lim2, lim2)
    g1 = jnp.ones((hidden_dim,), jnp.float32)
    be1 = jnp.zeros((hidden_dim,), jnp.float32)
    g2 = jnp.ones((hidden_dim,), jnp.float32)
    be2 = jnp.zeros((hidden_dim,), jnp.float32)
    w_emb = jax.random.normal(ks[4], (output_dim, hidden_dim), jnp.float32)
    return (w1, b1, g1, be1, w2, b2, g2, be2, w_emb)


def reference_forward(x, params):
    w1, b1, g1, be1, w2, b2, g2, be2, w_emb = params

    def bn(h, g, b):
        m = jnp.mean(h, axis=0, keepdims=True)
        v = jnp.mean((h - m) ** 2, axis=0, keepdims=True)
        return (h - m) / jnp.sqrt(v + BN_EPS) * g + b

    h = jax.nn.sigmoid(bn(x @ w1 + b1, g1, be1))
    h = jax.nn.sigmoid(bn(h @ w2 + b2, g2, be2))
    return jax.nn.sigmoid(h @ w_emb.T)


if __name__ == "__main__":
    key = jax.random.PRNGKey(0)
    kx, kp = jax.random.split(key)

    # Small demo shapes; vocab chosen to exercise multi-tile pipelining.
    B, INPUT_DIM, HIDDEN_DIM, OUTPUT_DIM = 8, 32, 32, 1024

    x = jax.random.normal(kx, (B, INPUT_DIM), jnp.float32)
    params = init_params(kp, INPUT_DIM, HIDDEN_DIM, OUTPUT_DIM)
    ref = reference_forward(x, params)

    # f32 embedding storage: tight tolerance vs. the JAX reference.
    prep_f32 = prepare_decoder_params(params)
    out = jax.block_until_ready(decoder_gvae_forward(x, prep_f32))
    assert out.shape == (B, OUTPUT_DIM)
    assert jnp.allclose(out, ref, atol=1e-4, rtol=1e-4), float(jnp.max(jnp.abs(out - ref)))

    # Padded-vocab path (V not a multiple of 128).
    V2 = 200
    params2 = init_params(kp, INPUT_DIM, HIDDEN_DIM, V2)
    prep2 = prepare_decoder_params(params2)
    out2 = jax.block_until_ready(decoder_gvae_forward(x, prep2))
    ref2 = reference_forward(x, params2)
    assert out2.shape == (B, V2)
    assert jnp.allclose(out2, ref2, atol=1e-4, rtol=1e-4), float(jnp.max(jnp.abs(out2 - ref2)))

    # bf16 embedding storage (halves the dominant HBM read); relaxed tolerance.
    prep_bf16 = prepare_decoder_params(params, emb_dtype=jnp.bfloat16)
    out3 = jax.block_until_ready(decoder_gvae_forward(x, prep_bf16))
    assert out3.shape == (B, OUTPUT_DIM)
    assert float(jnp.max(jnp.abs(out3.astype(jnp.float32) - ref))) < 1e-1

    print("KERNEL_OK")
</pallas_src>

<mosaic_0001>
module attributes {stable_mosaic.version = 11 : i64} {
  func.func @_transform_kernel(%arg0: memref<8x32xf32, #tpu.memory_space<vmem>>, %arg1: memref<32x32xf32, #tpu.memory_space<vmem>>, %arg2: memref<1x32xf32, #tpu.memory_space<vmem>>, %arg3: memref<1x32xf32, #tpu.memory_space<vmem>>, %arg4: memref<1x32xf32, #tpu.memory_space<vmem>>, %arg5: memref<32x32xf32, #tpu.memory_space<vmem>>, %arg6: memref<1x32xf32, #tpu.memory_space<vmem>>, %arg7: memref<1x32xf32, #tpu.memory_space<vmem>>, %arg8: memref<1x32xf32, #tpu.memory_space<vmem>>, %arg9: memref<8x32xf32, #tpu.memory_space<vmem>>) attributes {dimension_semantics = [], scalar_prefetch = 0 : i64, scratch_operands = 0 : i64, tpu.core_type = #tpu.core_type<tc>} {
    %c0 = arith.constant 0 : index
    %c0_0 = arith.constant 0 : index
    %0 = vector.load %arg0[%c0, %c0_0] : memref<8x32xf32, #tpu.memory_space<vmem>>, vector<8x32xf32>
    %c0_1 = arith.constant 0 : index
    %c0_2 = arith.constant 0 : index
    %1 = vector.load %arg1[%c0_1, %c0_2] : memref<32x32xf32, #tpu.memory_space<vmem>>, vector<32x32xf32>
    %c0_3 = arith.constant 0 : index
    %c0_4 = arith.constant 0 : index
    %2 = vector.load %arg2[%c0_3, %c0_4] : memref<1x32xf32, #tpu.memory_space<vmem>>, vector<1x32xf32>
    %c0_5 = arith.constant 0 : index
    %c0_6 = arith.constant 0 : index
    %3 = vector.load %arg3[%c0_5, %c0_6] : memref<1x32xf32, #tpu.memory_space<vmem>>, vector<1x32xf32>
    %c0_7 = arith.constant 0 : index
    %c0_8 = arith.constant 0 : index
    %4 = vector.load %arg4[%c0_7, %c0_8] : memref<1x32xf32, #tpu.memory_space<vmem>>, vector<1x32xf32>
    %cst = arith.constant dense<0.000000e+00> : vector<8x32xf32>
    %5 = tpu.matmul %0, %1, %cst {dimension_numbers = #tpu.dot_dimension_numbers<[1], [0], [0], [1], [0, 0, 1, 1], [], []>} : vector<8x32xf32>, vector<32x32xf32>, vector<8x32xf32> -> vector<8x32xf32>
    %6 = vector.broadcast %2 : vector<1x32xf32> to vector<8x32xf32>
    %7 = arith.addf %5, %6 : vector<8x32xf32>
    %cst_9 = arith.constant dense<0.000000e+00> : vector<32xf32>
    %8 = vector.multi_reduction <add>, %7, %cst_9 [0] : vector<8x32xf32> to vector<32xf32>
    %9 = vector.shape_cast %8 : vector<32xf32> to vector<1x32xf32>
    %cst_10 = arith.constant 8.000000e+00 : f32
    %10 = vector.broadcast %cst_10 : f32 to vector<1x32xf32>
    %11 = arith.divf %9, %10 : vector<1x32xf32>
    %12 = vector.broadcast %11 : vector<1x32xf32> to vector<8x32xf32>
    %13 = arith.subf %7, %12 : vector<8x32xf32>
    %14 = arith.mulf %13, %13 : vector<8x32xf32>
    %cst_11 = arith.constant dense<0.000000e+00> : vector<32xf32>
    %15 = vector.multi_reduction <add>, %14, %cst_11 [0] : vector<8x32xf32> to vector<32xf32>
    %16 = vector.shape_cast %15 : vector<32xf32> to vector<1x32xf32>
    %cst_12 = arith.constant 8.000000e+00 : f32
    %17 = vector.broadcast %cst_12 : f32 to vector<1x32xf32>
    %18 = arith.divf %16, %17 : vector<1x32xf32>
    %cst_13 = arith.constant 9.99999974E-6 : f32
    %19 = vector.broadcast %cst_13 : f32 to vector<1x32xf32>
    %20 = arith.addf %18, %19 : vector<1x32xf32>
    %21 = math.rsqrt %20 : vector<1x32xf32>
    %22 = vector.broadcast %21 : vector<1x32xf32> to vector<8x32xf32>
    %23 = arith.mulf %13, %22 : vector<8x32xf32>
    %24 = vector.broadcast %3 : vector<1x32xf32> to vector<8x32xf32>
    %25 = arith.mulf %23, %24 : vector<8x32xf32>
    %26 = vector.broadcast %4 : vector<1x32xf32> to vector<8x32xf32>
    %27 = arith.addf %25, %26 : vector<8x32xf32>
    %cst_14 = arith.constant 5.000000e-01 : f32
    %28 = vector.broadcast %cst_14 : f32 to vector<8x32xf32>
    %29 = arith.mulf %28, %27 : vector<8x32xf32>
    %30 = math.tanh %29 : vector<8x32xf32>
    %cst_15 = arith.constant 5.000000e-01 : f32
    %31 = vector.broadcast %cst_15 : f32 to vector<8x32xf32>
    %32 = arith.mulf %31, %30 : vector<8x32xf32>
    %cst_16 = arith.constant 5.000000e-01 : f32
    %33 = vector.broadcast %cst_16 : f32 to vector<8x32xf32>
    %34 = arith.addf %32, %33 : vector<8x32xf32>
    %c0_17 = arith.constant 0 : index
    %c0_18 = arith.constant 0 : index
    %35 = vector.load %arg5[%c0_17, %c0_18] : memref<32x32xf32, #tpu.memory_space<vmem>>, vector<32x32xf32>
    %c0_19 = arith.constant 0 : index
    %c0_20 = arith.constant 0 : index
    %36 = vector.load %arg6[%c0_19, %c0_20] : memref<1x32xf32, #tpu.memory_space<vmem>>, vector<1x32xf32>
    %c0_21 = arith.constant 0 : index
    %c0_22 = arith.constant 0 : index
    %37 = vector.load %arg7[%c0_21, %c0_22] : memref<1x32xf32, #tpu.memory_space<vmem>>, vector<1x32xf32>
    %c0_23 = arith.constant 0 : index
    %c0_24 = arith.constant 0 : index
    %38 = vector.load %arg8[%c0_23, %c0_24] : memref<1x32xf32, #tpu.memory_space<vmem>>, vector<1x32xf32>
    %cst_25 = arith.constant dense<0.000000e+00> : vector<8x32xf32>
    %39 = tpu.matmul %34, %35, %cst_25 {dimension_numbers = #tpu.dot_dimension_numbers<[1], [0], [0], [1], [0, 0, 1, 1], [], []>} : vector<8x32xf32>, vector<32x32xf32>, vector<8x32xf32> -> vector<8x32xf32>
    %40 = vector.broadcast %36 : vector<1x32xf32> to vector<8x32xf32>
    %41 = arith.addf %39, %40 : vector<8x32xf32>
    %cst_26 = arith.constant dense<0.000000e+00> : vector<32xf32>
    %42 = vector.multi_reduction <add>, %41, %cst_26 [0] : vector<8x32xf32> to vector<32xf32>
    %43 = vector.shape_cast %42 : vector<32xf32> to vector<1x32xf32>
    %cst_27 = arith.constant 8.000000e+00 : f32
    %44 = vector.broadcast %cst_27 : f32 to vector<1x32xf32>
    %45 = arith.divf %43, %44 : vector<1x32xf32>
    %46 = vector.broadcast %45 : vector<1x32xf32> to vector<8x32xf32>
    %47 = arith.subf %41, %46 : vector<8x32xf32>
    %48 = arith.mulf %47, %47 : vector<8x32xf32>
    %cst_28 = arith.constant dense<0.000000e+00> : vector<32xf32>
    %49 = vector.multi_reduction <add>, %48, %cst_28 [0] : vector<8x32xf32> to vector<32xf32>
    %50 = vector.shape_cast %49 : vector<32xf32> to vector<1x32xf32>
    %cst_29 = arith.constant 8.000000e+00 : f32
    %51 = vector.broadcast %cst_29 : f32 to vector<1x32xf32>
    %52 = arith.divf %50, %51 : vector<1x32xf32>
    %cst_30 = arith.constant 9.99999974E-6 : f32
    %53 = vector.broadcast %cst_30 : f32 to vector<1x32xf32>
    %54 = arith.addf %52, %53 : vector<1x32xf32>
    %55 = math.rsqrt %54 : vector<1x32xf32>
    %56 = vector.broadcast %55 : vector<1x32xf32> to vector<8x32xf32>
    %57 = arith.mulf %47, %56 : vector<8x32xf32>
    %58 = vector.broadcast %37 : vector<1x32xf32> to vector<8x32xf32>
    %59 = arith.mulf %57, %58 : vector<8x32xf32>
    %60 = vector.broadcast %38 : vector<1x32xf32> to vector<8x32xf32>
    %61 = arith.addf %59, %60 : vector<8x32xf32>
    %cst_31 = arith.constant 5.000000e-01 : f32
    %62 = vector.broadcast %cst_31 : f32 to vector<8x32xf32>
    %63 = arith.mulf %62, %61 : vector<8x32xf32>
    %64 = math.tanh %63 : vector<8x32xf32>
    %cst_32 = arith.constant 5.000000e-01 : f32
    %65 = vector.broadcast %cst_32 : f32 to vector<8x32xf32>
    %66 = arith.mulf %65, %64 : vector<8x32xf32>
    %cst_33 = arith.constant 5.000000e-01 : f32
    %67 = vector.broadcast %cst_33 : f32 to vector<8x32xf32>
    %68 = arith.addf %66, %67 : vector<8x32xf32>
    %c0_34 = arith.constant 0 : index
    %c0_35 = arith.constant 0 : index
    %69 = vector.load %arg9[%c0_34, %c0_35] : memref<8x32xf32, #tpu.memory_space<vmem>>, vector<8x32xf32>
    tpu.vector_store %arg9[%c0_34, %c0_35], %68 {strides = array<i32>} : memref<8x32xf32, #tpu.memory_space<vmem>>, vector<8x32xf32>,
    return
  }
}

</mosaic_0001>

<llo_original>
// kernel: tpu_custom_call.1
$region0: #{tpu_custom_call.1}
  #allocation0 [shape = 'u32[]', space=smem, size = 0x4, offset = 0x4, fixed_abs, tag = 'smem constant byte address 0x4 - core index']
  #allocation1 [shape = 'u32[144,128]{1,0:T(1,128)}', space=vmem, size = 0x12000, scoped, tag = 'internal scratch']
  %s0 = inlined_call_operand.hbm [shape: f32[8,32], index: 0, kind: input, shape index: {}]
  %s1 = inlined_call_operand.hbm [shape: f32[32,32], index: 1, kind: input, shape index: {}]
  %s2 = inlined_call_operand.vmem [shape: f32[1,32], index: 2, kind: input, shape index: {}]
  %s3 = inlined_call_operand.vmem [shape: f32[1,32], index: 3, kind: input, shape index: {}]
  %s4 = inlined_call_operand.vmem [shape: f32[1,32], index: 4, kind: input, shape index: {}]
  %s5 = inlined_call_operand.hbm [shape: f32[32,32], index: 5, kind: input, shape index: {}]
  %s6 = inlined_call_operand.vmem [shape: f32[1,32], index: 6, kind: input, shape index: {}]
  %s7 = inlined_call_operand.vmem [shape: f32[1,32], index: 7, kind: input, shape index: {}]
  %s8 = inlined_call_operand.vmem [shape: f32[1,32], index: 8, kind: input, shape index: {}]
  %s9 = inlined_call_operand.hbm [shape: f32[8,32], index: 9, kind: output, shape index: {}]
  %s10 = sld [smem:[#allocation0]]
  $region58: #{tpu_custom_call.1} parent=0
    _
  %s12 = ssub.s32 1, %s10
  %s13 = scalar_select 0, %s12, %s10
  $region1: #{tpu_custom_call.1} parent=0
    #allocation2 [shape = 'u8[4096]{0}', space=vmem, size = 0x1000, scoped, tag = 'input window, operand 0, single buffered']
    #allocation3 [shape = 's32[1]{0}', space=sflag, size = 0x4, scoped, tag = 'scoped memory for tpu_custom_call.1']
    #allocation4 [shape = 's32[1]{0}', space=sflag, size = 0x4, scoped, tag = 'scoped memory for tpu_custom_call.1']
    #allocation5 [shape = 'u8[16384]{0}', space=vmem, size = 0x4000, scoped, tag = 'input window, operand 1, single buffered']
    #allocation6 [shape = 's32[1]{0}', space=sflag, size = 0x4, scoped, tag = 'scoped memory for tpu_custom_call.1']
    #allocation7 [shape = 'u8[16384]{0}', space=vmem, size = 0x4000, scoped, tag = 'input window, operand 5, single buffered']
    #allocation8 [shape = 'u8[4096]{0}', space=vmem, size = 0x1000, scoped, tag = 'output window, operand 0, single buffered']
    %14 = vsyncpa [#allocation3], 0
    %15 = vsyncpa [#allocation6], 0
    %16 = vsyncpa [#allocation4], 0
    // Predicated region
    $region2: #{tpu_custom_call.1} parent=1 // pred_check
      _
    $region3: #{tpu_custom_call.1} parent=1 // pred_check_branch
      %18 = sbr.rel (0) target = $region5
    $region4: #{tpu_custom_call.1} parent=1 // pred_region
      %s20 = ssub.s32 128, 128
      %21 = vsyncadd [#allocation3], %s20
      %s23 = sshll.u32 [#allocation2], 4
      %s24 = int_to_ptr.vmem [resolvable:$true] %s23
      %26 = dma.hbm_to_vmem [thread:$0]  %s0, 128, %s24, [#allocation3]
    $region5: #{tpu_custom_call.1} parent=1 // pred_fallthru
      _
    // Predicated region
    $region6: #{tpu_custom_call.1} parent=1 // pred_check
      _
    $region7: #{tpu_custom_call.1} parent=1 // pred_check_branch
      %28 = sbr.rel (0) target = $region9
    $region8: #{tpu_custom_call.1} parent=1 // pred_region
      %s30 = ssub.s32 512, 512
      %31 = vsyncadd [#allocation6], %s30
      %s32 = sshll.u32 [#allocation5], 4
      %s33 = int_to_ptr.vmem [resolvable:$true] %s32
      %38 = dma.hbm_to_vmem [thread:$0]  %s1, 512, %s33, [#allocation6], 128, 128, 8
    $region9: #{tpu_custom_call.1} parent=1 // pred_fallthru
      _
    // Predicated region
    $region10: #{tpu_custom_call.1} parent=1 // pred_check
      _
    $region11: #{tpu_custom_call.1} parent=1 // pred_check_branch
      %40 = sbr.rel (0) target = $region13
    $region12: #{tpu_custom_call.1} parent=1 // pred_region
      _
    $region13: #{tpu_custom_call.1} parent=1 // pred_fallthru
      _
    // Predicated region
    $region14: #{tpu_custom_call.1} parent=1 // pred_check
      _
    $region15: #{tpu_custom_call.1} parent=1 // pred_check_branch
      %42 = sbr.rel (0) target = $region17
    $region16: #{tpu_custom_call.1} parent=1 // pred_region
      _
    $region17: #{tpu_custom_call.1} parent=1 // pred_fallthru
      _
    // Predicated region
    $region18: #{tpu_custom_call.1} parent=1 // pred_check
      _
    $region19: #{tpu_custom_call.1} parent=1 // pred_check_branch
      %44 = sbr.rel (0) target = $region21
    $region20: #{tpu_custom_call.1} parent=1 // pred_region
      _
    $region21: #{tpu_custom_call.1} parent=1 // pred_fallthru
      _
    // Predicated region
    $region22: #{tpu_custom_call.1} parent=1 // pred_check
      _
    $region23: #{tpu_custom_call.1} parent=1 // pred_check_branch
      %46 = sbr.rel (0) target = $region25
    $region24: #{tpu_custom_call.1} parent=1 // pred_region
      %s48 = ssub.s32 512, 512
      %49 = vsyncadd [#allocation6], %s48
      %s50 = sshll.u32 [#allocation7], 4
      %s51 = int_to_ptr.vmem [resolvable:$true] %s50
      %56 = dma.hbm_to_vmem [thread:$0]  %s5, 512, %s51, [#allocation6], 128, 128, 8
    $region25: #{tpu_custom_call.1} parent=1 // pred_fallthru
      _
    // Predicated region
    $region26: #{tpu_custom_call.1} parent=1 // pred_check
      _
    $region27: #{tpu_custom_call.1} parent=1 // pred_check_branch
      %58 = sbr.rel (0) target = $region29
    $region28: #{tpu_custom_call.1} parent=1 // pred_region
      _
    $region29: #{tpu_custom_call.1} parent=1 // pred_fallthru
      _
    // Predicated region
    $region30: #{tpu_custom_call.1} parent=1 // pred_check
      _
    $region31: #{tpu_custom_call.1} parent=1 // pred_check_branch
      %60 = sbr.rel (0) target = $region33
    $region32: #{tpu_custom_call.1} parent=1 // pred_region
      _
    $region33: #{tpu_custom_call.1} parent=1 // pred_fallthru
      _
    // Predicated region
    $region34: #{tpu_custom_call.1} parent=1 // pred_check
      _
    $region35: #{tpu_custom_call.1} parent=1 // pred_check_branch
      %62 = sbr.rel (0) target = $region37
    $region36: #{tpu_custom_call.1} parent=1 // pred_region
      _
    $region37: #{tpu_custom_call.1} parent=1 // pred_fallthru
      _
    // Predicated region
    $region38: #{tpu_custom_call.1} parent=1 // pred_check
      _
    $region39: #{tpu_custom_call.1} parent=1 // pred_check_branch
      %64 = sbr.rel (0) target = $region41
    $region40: #{tpu_custom_call.1} parent=1 // pred_region
      %65 = dma.done [#allocation3], 128
    $region41: #{tpu_custom_call.1} parent=1 // pred_fallthru
      _
    // Predicated region
    $region42: #{tpu_custom_call.1} parent=1 // pred_check
      _
    $region43: #{tpu_custom_call.1} parent=1 // pred_check_branch
      %67 = sbr.rel (0) target = $region45
    $region44: #{tpu_custom_call.1} parent=1 // pred_region
      %68 = dma.done [#allocation6], 512
    $region45: #{tpu_custom_call.1} parent=1 // pred_fallthru
      _
    // Predicated region
    $region46: #{tpu_custom_call.1} parent=1 // pred_check
      _
    $region47: #{tpu_custom_call.1} parent=1 // pred_check_branch
      %70 = sbr.rel (0) target = $region49
    $region48: #{tpu_custom_call.1} parent=1 // pred_region
      %71 = dma.done [#allocation6], 512
    $region49: #{tpu_custom_call.1} parent=1 // pred_fallthru
      _
    %v72 = vld [vmem:[#allocation2] sm:$0xff]
    %v73 = vld [vmem:[#allocation5] sm:$0xff]
    %v74 = vld [vmem:[#allocation5 + $0x8] sm:$0xff]
    %v75 = vld [vmem:[#allocation5 + $0x10] sm:$0xff]
    %v76 = vld [vmem:[#allocation5 + $0x18] sm:$0xff]
    %v77 = vld [vmem:[%s2] sm:$0x1]
    %v78 = vld [vmem:[%s3] sm:$0x1]
    %v79 = vld [vmem:[%s4] sm:$0x1]
    %v81 = vlaneseq
    %v82 = vshrl.u32 %v81, 7
    %v83 = vsub.s32 0, %v82
    %v84 = vrot.slane %v77, %v83
    %vm86 = vcmask 261120
    %v88 = vsel %vm86, %v72, 0
    %90 = vmatprep.subr.mxu0 0.0
    %91 = vmatpush1.msra.mxu0 %v73
    %92 = vmatprep.subr.mxu0 0.0
    %93 = vmatpush1.msra.mxu0 %v74
    %94 = vmatprep.subr.mxu0 0.0
    %95 = vmatpush1.msra.mxu0 %v75
    %96 = vmatprep.subr.mxu0 0.0
    %97 = vmatpush1.msra.mxu0 %v76
    %98 = vmatprep.subr.mxu0 0.0
    %99 = vmatpush1.msra.mxu0 0.0
    %100 = vmatprep.subr.mxu0 0.0
    %101 = vmatpush1.msra.mxu0 0.0
    %102 = vmatprep.subr.mxu0 0.0
    %103 = vmatpush1.msra.mxu0 0.0
    %104 = vmatprep.subr.mxu0 0.0
    %105 = vmatpush1.msra.mxu0 0.0
    %106 = vmatprep.subr.mxu0 0.0
    %107 = vmatpush1.msra.mxu0 0.0
    %108 = vmatprep.subr.mxu0 0.0
    %109 = vmatpush1.msra.mxu0 0.0
    %110 = vmatprep.subr.mxu0 0.0
    %111 = vmatpush1.msra.mxu0 0.0
    %112 = vmatprep.subr.mxu0 0.0
    %113 = vmatpush1.msra.mxu0 0.0
    %114 = vmatprep.subr.mxu0 0.0
    %115 = vmatpush1.msra.mxu0 0.0
    %116 = vmatprep.subr.mxu0 0.0
    %117 = vmatpush1.msra.mxu0 0.0
    %118 = vmatprep.subr.mxu0 0.0
    %119 = vmatpush1.msra.mxu0 0.0
    %120 = vmatprep.subr.mxu0 0.0
    %121 = vmatpush1.msra.mxu0 0.0
    %122 = vmatprep.subr.mxu0 0.0
    %123 = vmatpush1.msra.mxu0 0.0
    %124 = vmatprep.subr.mxu0 0.0
    %125 = vmatpush1.msra.mxu0 0.0
    %126 = vmatprep.subr.mxu0 0.0
    %127 = vmatpush1.msra.mxu0 0.0
    %128 = vmatprep.subr.mxu0 0.0
    %129 = vmatpush1.msra.mxu0 0.0
    %130 = vmatprep.subr.mxu0 0.0
    %131 = vmatpush1.msra.mxu0 0.0
    %132 = vmatprep.subr.mxu0 0.0
    %133 = vmatpush1.msra.mxu0 0.0
    %134 = vmatprep.subr.mxu0 0.0
    %135 = vmatpush1.msra.mxu0 0.0
    %136 = vmatprep.subr.mxu0 0.0
    %137 = vmatpush1.msra.mxu0 0.0
    %138 = vmatprep.subr.mxu0 0.0
    %139 = vmatpush1.msra.mxu0 0.0
    %140 = vmatprep.subr.mxu0 0.0
    %141 = vmatpush1.msra.mxu0 0.0
    %142 = vmatprep.subr.mxu0 0.0
    %143 = vmatpush1.msra.mxu0 0.0
    %144 = vmatprep.subr.mxu0 0.0
    %145 = vmatpush1.msra.mxu0 0.0
    %146 = vmatprep.subr.mxu0 0.0
    %147 = vmatpush1.msra.mxu0 0.0
    %148 = vmatprep.subr.mxu0 0.0
    %149 = vmatpush1.msra.mxu0 0.0
    %150 = vmatprep.subr.mxu0 0.0
    %151 = vmatpush1.msra.mxu0 0.0
    %152 = vmatprep.subr.mxu0 0.0
    %153 = vmatpush1.msra.mxu0 0.0
    %154 = vmatprep.mubr.f32.mxu0 0.0
    %155 = vmatmul.mubr.f32.gmra.mrb[0].mxu0 %v88
    %v156 = vpop.f32.mrb[0].mxu0
    %v157 = vadd.f32 %v84, %v156
    %v158 = vpop.f32.mrb[0].mxu0
    %159 = vdwg.mxu0
    %v160 = vsel %vm86, %v157, 0.0
    %v161 = vrot.slane %v160, 4
    %v162 = vadd.f32 %v160, %v161
    %v163 = vrot.slane %v162, 2
    %v164 = vadd.f32 %v162, %v163
    %v165 = vrot.slane %v164, 1
    %v166 = vadd.f32 %v164, %v165
    %v167 = vrcp.pop 8.0
    %v168 = vmul.f32 %v166, %v167
    %v169 = vsub.f32 %v157, %v168
    %v170 = vmul.f32 %v169, %v169
    %v171 = vsel %vm86, %v170, 0.0
    %v172 = vrot.slane %v171, 4
    %v173 = vadd.f32 %v171, %v172
    %v174 = vrot.slane %v173, 2
    %v175 = vadd.f32 %v173, %v174
    %v176 = vrot.slane %v175, 1
    %v177 = vadd.f32 %v175, %v176
    %v178 = vmul.f32 %v177, %v167
    %v179 = vadd.f32 %v178, 1e-05
    %v180 = vrsqrt.pop %v179
    %v181 = vmul.f32 %v169, %v180
    %v183 = vlaneseq
    %v184 = vshrl.u32 %v183, 7
    %v185 = vsub.s32 0, %v184
    %v186 = vrot.slane %v78, %v185
    %v188 = vmul.f32 %v181, %v186
    %v190 = vlaneseq
    %v191 = vshrl.u32 %v190, 7
    %v192 = vsub.s32 0, %v191
    %v193 = vrot.slane %v79, %v192
    %v195 = vadd.f32 %v188, %v193
    %v196 = vmul.f32 %v195, 0.5
    %v197 = vtanh.pop %v196
    %v198 = vmul.f32 %v197, 0.5
    %v199 = vadd.f32 %v198, 0.5
    %v200 = vld [vmem:[#allocation7] sm:$0xff]
    %v201 = vld [vmem:[#allocation7 + $0x8] sm:$0xff]
    %v202 = vld [vmem:[#allocation7 + $0x10] sm:$0xff]
    %v203 = vld [vmem:[#allocation7 + $0x18] sm:$0xff]
    %v204 = vld [vmem:[%s6] sm:$0x1]
    %v205 = vld [vmem:[%s7] sm:$0x1]
    %v206 = vld [vmem:[%s8] sm:$0x1]
    %v208 = vlaneseq
    %v209 = vshrl.u32 %v208, 7
    %v210 = vsub.s32 0, %v209
    %v211 = vrot.slane %v204, %v210
    %v214 = vsel %vm86, %v199, 0
    %216 = vmatprep.subr.mxu0 0.0
    %217 = vmatpush1.msra.mxu0 %v200
    %218 = vmatprep.subr.mxu0 0.0
    %219 = vmatpush1.msra.mxu0 %v201
    %220 = vmatprep.subr.mxu0 0.0
    %221 = vmatpush1.msra.mxu0 %v202
    %222 = vmatprep.subr.mxu0 0.0
    %223 = vmatpush1.msra.mxu0 %v203
    %224 = vmatprep.subr.mxu0 0.0
    %225 = vmatpush1.msra.mxu0 0.0
    %226 = vmatprep.subr.mxu0 0.0
    %227 = vmatpush1.msra.mxu0 0.0
    %228 = vmatprep.subr.mxu0 0.0
    %229 = vmatpush1.msra.mxu0 0.0
    %230 = vmatprep.subr.mxu0 0.0
    %231 = vmatpush1.msra.mxu0 0.0
    %232 = vmatprep.subr.mxu0 0.0
    %233 = vmatpush1.msra.mxu0 0.0
    %234 = vmatprep.subr.mxu0 0.0
    %235 = vmatpush1.msra.mxu0 0.0
    %236 = vmatprep.subr.mxu0 0.0
    %237 = vmatpush1.msra.mxu0 0.0
    %238 = vmatprep.subr.mxu0 0.0
    %239 = vmatpush1.msra.mxu0 0.0
    %240 = vmatprep.subr.mxu0 0.0
    %241 = vmatpush1.msra.mxu0 0.0
    %242 = vmatprep.subr.mxu0 0.0
    %243 = vmatpush1.msra.mxu0 0.0
    %244 = vmatprep.subr.mxu0 0.0
    %245 = vmatpush1.msra.mxu0 0.0
    %246 = vmatprep.subr.mxu0 0.0
    %247 = vmatpush1.msra.mxu0 0.0
    %248 = vmatprep.subr.mxu0 0.0
    %249 = vmatpush1.msra.mxu0 0.0
    %250 = vmatprep.subr.mxu0 0.0
    %251 = vmatpush1.msra.mxu0 0.0
    %252 = vmatprep.subr.mxu0 0.0
    %253 = vmatpush1.msra.mxu0 0.0
    %254 = vmatprep.subr.mxu0 0.0
    %255 = vmatpush1.msra.mxu0 0.0
    %256 = vmatprep.subr.mxu0 0.0
    %257 = vmatpush1.msra.mxu0 0.0
    %258 = vmatprep.subr.mxu0 0.0
    %259 = vmatpush1.msra.mxu0 0.0
    %260 = vmatprep.subr.mxu0 0.0
    %261 = vmatpush1.msra.mxu0 0.0
    %262 = vmatprep.subr.mxu0 0.0
    %263 = vmatpush1.msra.mxu0 0.0
    %264 = vmatprep.subr.mxu0 0.0
    %265 = vmatpush1.msra.mxu0 0.0
    %266 = vmatprep.subr.mxu0 0.0
    %267 = vmatpush1.msra.mxu0 0.0
    %268 = vmatprep.subr.mxu0 0.0
    %269 = vmatpush1.msra.mxu0 0.0
    %270 = vmatprep.subr.mxu0 0.0
    %271 = vmatpush1.msra.mxu0 0.0
    %272 = vmatprep.subr.mxu0 0.0
    %273 = vmatpush1.msra.mxu0 0.0
    %274 = vmatprep.subr.mxu0 0.0
    %275 = vmatpush1.msra.mxu0 0.0
    %276 = vmatprep.subr.mxu0 0.0
    %277 = vmatpush1.msra.mxu0 0.0
    %278 = vmatprep.subr.mxu0 0.0
    %279 = vmatpush1.msra.mxu0 0.0
    %280 = vmatprep.mubr.f32.mxu0 0.0
    %281 = vmatmul.mubr.f32.gmra.mrb[0].mxu0 %v214
    %v282 = vpop.f32.mrb[0].mxu0
    %v283 = vadd.f32 %v211, %v282
    %v284 = vpop.f32.mrb[0].mxu0
    %285 = vdwg.mxu0
    %v286 = vsel %vm86, %v283, 0.0
    %v287 = vrot.slane %v286, 4
    %v288 = vadd.f32 %v286, %v287
    %v289 = vrot.slane %v288, 2
    %v290 = vadd.f32 %v288, %v289
    %v291 = vrot.slane %v290, 1
    %v292 = vadd.f32 %v290, %v291
    %v293 = vmul.f32 %v292, %v167
    %v294 = vsub.f32 %v283, %v293
    %v295 = vmul.f32 %v294, %v294
    %v296 = vsel %vm86, %v295, 0.0
    %v297 = vrot.slane %v296, 4
    %v298 = vadd.f32 %v296, %v297
    %v299 = vrot.slane %v298, 2
    %v300 = vadd.f32 %v298, %v299
    %v301 = vrot.slane %v300, 1
    %v302 = vadd.f32 %v300, %v301
    %v303 = vmul.f32 %v302, %v167
    %v304 = vadd.f32 %v303, 1e-05
    %v305 = vrsqrt.pop %v304
    %v306 = vmul.f32 %v294, %v305
    %v308 = vlaneseq
    %v309 = vshrl.u32 %v308, 7
    %v310 = vsub.s32 0, %v309
    %v311 = vrot.slane %v205, %v310
    %v313 = vmul.f32 %v306, %v311
    %v315 = vlaneseq
    %v316 = vshrl.u32 %v315, 7
    %v317 = vsub.s32 0, %v316
    %v318 = vrot.slane %v206, %v317
    %v320 = vadd.f32 %v313, %v318
    %v321 = vmul.f32 %v320, 0.5
    %v322 = vtanh.pop %v321
    %v323 = vmul.f32 %v322, 0.5
    %v324 = vadd.f32 %v323, 0.5
    %325 = vst.msk [vmem:[#allocation8] sm:$0xff] %vm86, %v324
    // Predicated region
    $region50: #{tpu_custom_call.1} parent=1 // pred_check
      _
    $region51: #{tpu_custom_call.1} parent=1 // pred_check_branch
      %327 = sbr.rel (0) target = $region53
    $region52: #{tpu_custom_call.1} parent=1 // pred_region
      %s329 = ssub.s32 128, 128
      %330 = vsyncadd [#allocation4], %s329
      %s332 = sshll.u32 [#allocation8], 4
      %s333 = int_to_ptr.vmem [resolvable:$true] %s332
      %335 = dma.vmem_to_hbm [thread:$0]  %s333, 128, %s9, [#allocation4]
    $region53: #{tpu_custom_call.1} parent=1 // pred_fallthru
      _
    // Predicated region
    $region54: #{tpu_custom_call.1} parent=1 // pred_check
      _
    $region55: #{tpu_custom_call.1} parent=1 // pred_check_branch
      %337 = sbr.rel (0) target = $region57
    $region56: #{tpu_custom_call.1} parent=1 // pred_region
      %338 = dma.done [#allocation4], 128
    $region57: #{tpu_custom_call.1} parent=1 // pred_fallthru
      _
    %339 = vsyncpa [#allocation3], 1
    %340 = vsyncpa [#allocation6], 1
    %341 = vsyncpa [#allocation4], 1

</llo_original>
